<compile_context>
chip_gen: v5e
topology: v5e:2x2
jax: 0.10.0
libtpu: 0.0.40
codegen_flags: <defaults>
</compile_context>

<pallas_src>
import jax
import jax.numpy as jnp
from jax.experimental import pallas as pl
from jax.experimental.pallas import tpu as pltpu


def add_kernel(a_ref, b_ref, o_ref):
    # x195 = x194 + x190
    o_ref[...] = a_ref[...] + b_ref[...]


def _num_row_tiles(S: int) -> int:
    """Row-axis split: 2 parallel tiles on v7x (2 TCs/chip), gridless otherwise."""
    try:
        kind = jax.devices()[0].device_kind.lower()
    except Exception:  # pragma: no cover - defensive; fall back to gridless
        kind = ""
    if "v7" in kind and S % 2 == 0 and (S // 2) % 8 == 0:
        return 2
    return 1


def pallas_add(x194, x190):
    assert x194.shape == x190.shape and x194.dtype == x190.dtype
    orig_shape = x194.shape
    H = orig_shape[-1]
    # Flatten the degenerate batch dim: (1, S, H) -> (S, H). H=768 is the
    # lane axis (multiple of 128), S=384 the sublane axis (multiple of 8).
    a2 = x194.reshape(-1, H)
    b2 = x190.reshape(-1, H)
    S = a2.shape[0]

    itemsize = jnp.dtype(a2.dtype).itemsize
    cost = pl.CostEstimate(
        flops=S * H,
        transcendentals=0,
        bytes_accessed=3 * S * H * itemsize,
    )

    n_tiles = _num_row_tiles(S)
    if n_tiles == 1:
        # Gridless: single ~1.1 MB/operand VMEM slab, one DMA each way.
        vmem_spec = pl.BlockSpec(memory_space=pltpu.MemorySpace.VMEM)
        out2 = pl.pallas_call(
            add_kernel,
            out_shape=jax.ShapeDtypeStruct(a2.shape, a2.dtype),
            in_specs=[vmem_spec, vmem_spec],
            out_specs=vmem_spec,
            input_output_aliases={0: 0},
            cost_estimate=cost,
        )(a2, b2)
    else:
        # v7x: 1-D parallel grid over rows; each TC handles (S/2, 768).
        tile_rows = S // n_tiles  # multiple of 8; lane dim stays full 768
        spec = pl.BlockSpec((tile_rows, H), lambda i: (i, 0))
        out2 = pl.pallas_call(
            add_kernel,
            out_shape=jax.ShapeDtypeStruct(a2.shape, a2.dtype),
            grid=(n_tiles,),
            in_specs=[spec, spec],
            out_specs=spec,
            input_output_aliases={0: 0},
            cost_estimate=cost,
            compiler_params=pltpu.CompilerParams(
                dimension_semantics=("parallel",)),
        )(a2, b2)
    return out2.reshape(orig_shape)


if __name__ == "__main__":
    key = jax.random.PRNGKey(0)
    k1, k2 = jax.random.split(key)
    # Shapes implied by the module's forward: (1, 384, 768)
    x194 = jax.random.normal(k1, (1, 384, 768), dtype=jnp.float32)
    x190 = jax.random.normal(k2, (1, 384, 768), dtype=jnp.float32)

    out = pallas_add(x194, x190)
    out = jax.block_until_ready(out)

    ref = x194 + x190
    assert out.shape == (1, 384, 768)
    assert jnp.allclose(out, ref, atol=1e-6, rtol=1e-6)
    print("KERNEL_OK")
</pallas_src>

<mosaic_0001>
module attributes {stable_mosaic.version = 11 : i64} {
  func.func @add_kernel(%arg0: memref<384x768xf32, #tpu.memory_space<vmem>>, %arg1: memref<384x768xf32, #tpu.memory_space<vmem>>, %arg2: memref<384x768xf32, #tpu.memory_space<vmem>>) attributes {dimension_semantics = [], scalar_prefetch = 0 : i64, scratch_operands = 0 : i64, tpu.core_type = #tpu.core_type<tc>} {
    %c0 = arith.constant 0 : index
    %c0_0 = arith.constant 0 : index
    %0 = vector.load %arg0[%c0, %c0_0] : memref<384x768xf32, #tpu.memory_space<vmem>>, vector<384x768xf32>
    %c0_1 = arith.constant 0 : index
    %c0_2 = arith.constant 0 : index
    %1 = vector.load %arg1[%c0_1, %c0_2] : memref<384x768xf32, #tpu.memory_space<vmem>>, vector<384x768xf32>
    %2 = arith.addf %0, %1 : vector<384x768xf32>
    %c0_3 = arith.constant 0 : index
    %c0_4 = arith.constant 0 : index
    %3 = vector.load %arg2[%c0_3, %c0_4] : memref<384x768xf32, #tpu.memory_space<vmem>>, vector<384x768xf32>
    tpu.vector_store %arg2[%c0_3, %c0_4], %2 {strides = array<i32>} : memref<384x768xf32, #tpu.memory_space<vmem>>, vector<384x768xf32>,
    return
  }
}

</mosaic_0001>

<llo_original>
// kernel: tpu_custom_call.1
$region0: #{tpu_custom_call.1}
  #allocation0 [shape = 'u32[]', space=smem, size = 0x4, offset = 0x4, fixed_abs, tag = 'smem constant byte address 0x4 - core index']
  #allocation1 [shape = 'u32[72,128]{1,0:T(1,128)}', space=vmem, size = 0x9000, scoped, tag = 'internal scratch']
  %s0 = inlined_call_operand.hbm [shape: f32[384,768], index: 0, kind: input, shape index: {}, may-alias: {0,2}]
  %s1 = inlined_call_operand.vmem [shape: f32[384,768], index: 1, kind: input, shape index: {}]
  %s2 = inlined_call_operand.hbm [shape: f32[384,768], index: 2, kind: output, shape index: {}, may-alias: {0,2}]
  %s3 = sld [smem:[#allocation0]]
  $region22: #{tpu_custom_call.1} parent=0
    _
  %s5 = ssub.s32 1, %s3
  %s6 = scalar_select 0, %s5, %s3
  $region1: #{tpu_custom_call.1} parent=0
    #allocation2 [shape = 'u8[1179648]{0}', space=vmem, size = 0x120000, scoped, tag = 'input window, operand 0, single buffered']
    #allocation3 [shape = 's32[1]{0}', space=sflag, size = 0x4, scoped, tag = 'scoped memory for tpu_custom_call.1']
    #allocation4 [shape = 's32[1]{0}', space=sflag, size = 0x4, scoped, tag = 'scoped memory for tpu_custom_call.1']
    #allocation5 [shape = 'u8[1179648]{0}', space=vmem, size = 0x120000, scoped, tag = 'output window, operand 0, single buffered']
    %7 = vsyncpa [#allocation3], 0
    %8 = vsyncpa [#allocation4], 0
    // Predicated region
    $region2: #{tpu_custom_call.1} parent=1 // pred_check
      _
    $region3: #{tpu_custom_call.1} parent=1 // pred_check_branch
      %10 = sbr.rel (0) target = $region5
    $region4: #{tpu_custom_call.1} parent=1 // pred_region
      %12 = vsyncadd [#allocation3], 0
      %s13 = sshll.u32 %s0, 4
      %s14 = int_to_ptr.hbm [resolvable:$true] %s13
      %s15 = sshll.u32 [#allocation2], 4
      %s16 = int_to_ptr.vmem [resolvable:$true] %s15
      %21 = dma.hbm_to_vmem [thread:$0]  %s14, 36864, %s16, [#allocation3], 768, 768, 48
    $region5: #{tpu_custom_call.1} parent=1 // pred_fallthru
      _
    // Predicated region
    $region6: #{tpu_custom_call.1} parent=1 // pred_check
      _
    $region7: #{tpu_custom_call.1} parent=1 // pred_check_branch
      %23 = sbr.rel (0) target = $region9
    $region8: #{tpu_custom_call.1} parent=1 // pred_region
      _
    $region9: #{tpu_custom_call.1} parent=1 // pred_fallthru
      _
    // Predicated region
    $region10: #{tpu_custom_call.1} parent=1 // pred_check
      _
    $region11: #{tpu_custom_call.1} parent=1 // pred_check_branch
      %25 = sbr.rel (0) target = $region13
    $region12: #{tpu_custom_call.1} parent=1 // pred_region
      %27 = dma.done [#allocation3], 36864
    $region13: #{tpu_custom_call.1} parent=1 // pred_fallthru
      _
    %v28 = vld [vmem:[#allocation2] sm:$0xff]
    %v29 = vld [vmem:[#allocation2 + $0x8] sm:$0xff]
    %v30 = vld [vmem:[#allocation2 + $0x10] sm:$0xff]
    %v31 = vld [vmem:[#allocation2 + $0x18] sm:$0xff]
    %v32 = vld [vmem:[#allocation2 + $0x20] sm:$0xff]
    %v33 = vld [vmem:[#allocation2 + $0x28] sm:$0xff]
    %v34 = vld [vmem:[#allocation2 + $0x30] sm:$0xff]
    %v35 = vld [vmem:[#allocation2 + $0x38] sm:$0xff]
    %v36 = vld [vmem:[#allocation2 + $0x40] sm:$0xff]
    %v37 = vld [vmem:[#allocation2 + $0x48] sm:$0xff]
    %v38 = vld [vmem:[#allocation2 + $0x50] sm:$0xff]
    %v39 = vld [vmem:[#allocation2 + $0x58] sm:$0xff]
    %v40 = vld [vmem:[#allocation2 + $0x60] sm:$0xff]
    %v41 = vld [vmem:[#allocation2 + $0x68] sm:$0xff]
    %v42 = vld [vmem:[#allocation2 + $0x70] sm:$0xff]
    %v43 = vld [vmem:[#allocation2 + $0x78] sm:$0xff]
    %v44 = vld [vmem:[#allocation2 + $0x80] sm:$0xff]
    %v45 = vld [vmem:[#allocation2 + $0x88] sm:$0xff]
    %v46 = vld [vmem:[#allocation2 + $0x90] sm:$0xff]
    %v47 = vld [vmem:[#allocation2 + $0x98] sm:$0xff]
    %v48 = vld [vmem:[#allocation2 + $0xa0] sm:$0xff]
    %v49 = vld [vmem:[#allocation2 + $0xa8] sm:$0xff]
    %v50 = vld [vmem:[#allocation2 + $0xb0] sm:$0xff]
    %v51 = vld [vmem:[#allocation2 + $0xb8] sm:$0xff]
    %v52 = vld [vmem:[#allocation2 + $0xc0] sm:$0xff]
    %v53 = vld [vmem:[#allocation2 + $0xc8] sm:$0xff]
    %v54 = vld [vmem:[#allocation2 + $0xd0] sm:$0xff]
    %v55 = vld [vmem:[#allocation2 + $0xd8] sm:$0xff]
    %v56 = vld [vmem:[#allocation2 + $0xe0] sm:$0xff]
    %v57 = vld [vmem:[#allocation2 + $0xe8] sm:$0xff]
    %v58 = vld [vmem:[#allocation2 + $0xf0] sm:$0xff]
    %v59 = vld [vmem:[#allocation2 + $0xf8] sm:$0xff]
    %v60 = vld [vmem:[#allocation2 + $0x100] sm:$0xff]
    %v61 = vld [vmem:[#allocation2 + $0x108] sm:$0xff]
    %v62 = vld [vmem:[#allocation2 + $0x110] sm:$0xff]
    %v63 = vld [vmem:[#allocation2 + $0x118] sm:$0xff]
    %v64 = vld [vmem:[#allocation2 + $0x120] sm:$0xff]
    %v65 = vld [vmem:[#allocation2 + $0x128] sm:$0xff]
    %v66 = vld [vmem:[#allocation2 + $0x130] sm:$0xff]
    %v67 = vld [vmem:[#allocation2 + $0x138] sm:$0xff]
    %v68 = vld [vmem:[#allocation2 + $0x140] sm:$0xff]
    %v69 = vld [vmem:[#allocation2 + $0x148] sm:$0xff]
    %v70 = vld [vmem:[#allocation2 + $0x150] sm:$0xff]
    %v71 = vld [vmem:[#allocation2 + $0x158] sm:$0xff]
    %v72 = vld [vmem:[#allocation2 + $0x160] sm:$0xff]
    %v73 = vld [vmem:[#allocation2 + $0x168] sm:$0xff]
    %v74 = vld [vmem:[#allocation2 + $0x170] sm:$0xff]
    %v75 = vld [vmem:[#allocation2 + $0x178] sm:$0xff]
    %v76 = vld [vmem:[#allocation2 + $0x180] sm:$0xff]
    %v77 = vld [vmem:[#allocation2 + $0x188] sm:$0xff]
    %v78 = vld [vmem:[#allocation2 + $0x190] sm:$0xff]
    %v79 = vld [vmem:[#allocation2 + $0x198] sm:$0xff]
    %v80 = vld [vmem:[#allocation2 + $0x1a0] sm:$0xff]
    %v81 = vld [vmem:[#allocation2 + $0x1a8] sm:$0xff]
    %v82 = vld [vmem:[#allocation2 + $0x1b0] sm:$0xff]
    %v83 = vld [vmem:[#allocation2 + $0x1b8] sm:$0xff]
    %v84 = vld [vmem:[#allocation2 + $0x1c0] sm:$0xff]
    %v85 = vld [vmem:[#allocation2 + $0x1c8] sm:$0xff]
    %v86 = vld [vmem:[#allocation2 + $0x1d0] sm:$0xff]
    %v87 = vld [vmem:[#allocation2 + $0x1d8] sm:$0xff]
    %v88 = vld [vmem:[#allocation2 + $0x1e0] sm:$0xff]
    %v89 = vld [vmem:[#allocation2 + $0x1e8] sm:$0xff]
    %v90 = vld [vmem:[#allocation2 + $0x1f0] sm:$0xff]
    %v91 = vld [vmem:[#allocation2 + $0x1f8] sm:$0xff]
    %v92 = vld [vmem:[#allocation2 + $0x200] sm:$0xff]
    %v93 = vld [vmem:[#allocation2 + $0x208] sm:$0xff]
    %v94 = vld [vmem:[#allocation2 + $0x210] sm:$0xff]
    %v95 = vld [vmem:[#allocation2 + $0x218] sm:$0xff]
    %v96 = vld [vmem:[#allocation2 + $0x220] sm:$0xff]
    %v97 = vld [vmem:[#allocation2 + $0x228] sm:$0xff]
    %v98 = vld [vmem:[#allocation2 + $0x230] sm:$0xff]
    %v99 = vld [vmem:[#allocation2 + $0x238] sm:$0xff]
    %v100 = vld [vmem:[#allocation2 + $0x240] sm:$0xff]
    %v101 = vld [vmem:[#allocation2 + $0x248] sm:$0xff]
    %v102 = vld [vmem:[#allocation2 + $0x250] sm:$0xff]
    %v103 = vld [vmem:[#allocation2 + $0x258] sm:$0xff]
    %v104 = vld [vmem:[#allocation2 + $0x260] sm:$0xff]
    %v105 = vld [vmem:[#allocation2 + $0x268] sm:$0xff]
    %v106 = vld [vmem:[#allocation2 + $0x270] sm:$0xff]
    %v107 = vld [vmem:[#allocation2 + $0x278] sm:$0xff]
    %v108 = vld [vmem:[#allocation2 + $0x280] sm:$0xff]
    %v109 = vld [vmem:[#allocation2 + $0x288] sm:$0xff]
    %v110 = vld [vmem:[#allocation2 + $0x290] sm:$0xff]
    %v111 = vld [vmem:[#allocation2 + $0x298] sm:$0xff]
    %v112 = vld [vmem:[#allocation2 + $0x2a0] sm:$0xff]
    %v113 = vld [vmem:[#allocation2 + $0x2a8] sm:$0xff]
    %v114 = vld [vmem:[#allocation2 + $0x2b0] sm:$0xff]
    %v115 = vld [vmem:[#allocation2 + $0x2b8] sm:$0xff]
    %v116 = vld [vmem:[#allocation2 + $0x2c0] sm:$0xff]
    %v117 = vld [vmem:[#allocation2 + $0x2c8] sm:$0xff]
    %v118 = vld [vmem:[#allocation2 + $0x2d0] sm:$0xff]
    %v119 = vld [vmem:[#allocation2 + $0x2d8] sm:$0xff]
    %v120 = vld [vmem:[#allocation2 + $0x2e0] sm:$0xff]
    %v121 = vld [vmem:[#allocation2 + $0x2e8] sm:$0xff]
    %v122 = vld [vmem:[#allocation2 + $0x2f0] sm:$0xff]
    %v123 = vld [vmem:[#allocation2 + $0x2f8] sm:$0xff]
    %v124 = vld [vmem:[#allocation2 + $0x300] sm:$0xff]
    %v125 = vld [vmem:[#allocation2 + $0x308] sm:$0xff]
    %v126 = vld [vmem:[#allocation2 + $0x310] sm:$0xff]
    %v127 = vld [vmem:[#allocation2 + $0x318] sm:$0xff]
    %v128 = vld [vmem:[#allocation2 + $0x320] sm:$0xff]
    %v129 = vld [vmem:[#allocation2 + $0x328] sm:$0xff]
    %v130 = vld [vmem:[#allocation2 + $0x330] sm:$0xff]
    %v131 = vld [vmem:[#allocation2 + $0x338] sm:$0xff]
    %v132 = vld [vmem:[#allocation2 + $0x340] sm:$0xff]
    %v133 = vld [vmem:[#allocation2 + $0x348] sm:$0xff]
    %v134 = vld [vmem:[#allocation2 + $0x350] sm:$0xff]
    %v135 = vld [vmem:[#allocation2 + $0x358] sm:$0xff]
    %v136 = vld [vmem:[#allocation2 + $0x360] sm:$0xff]
    %v137 = vld [vmem:[#allocation2 + $0x368] sm:$0xff]
    %v138 = vld [vmem:[#allocation2 + $0x370] sm:$0xff]
    %v139 = vld [vmem:[#allocation2 + $0x378] sm:$0xff]
    %v140 = vld [vmem:[#allocation2 + $0x380] sm:$0xff]
    %v141 = vld [vmem:[#allocation2 + $0x388] sm:$0xff]
    %v142 = vld [vmem:[#allocation2 + $0x390] sm:$0xff]
    %v143 = vld [vmem:[#allocation2 + $0x398] sm:$0xff]
    %v144 = vld [vmem:[#allocation2 + $0x3a0] sm:$0xff]
    %v145 = vld [vmem:[#allocation2 + $0x3a8] sm:$0xff]
    %v146 = vld [vmem:[#allocation2 + $0x3b0] sm:$0xff]
    %v147 = vld [vmem:[#allocation2 + $0x3b8] sm:$0xff]
    %v148 = vld [vmem:[#allocation2 + $0x3c0] sm:$0xff]
    %v149 = vld [vmem:[#allocation2 + $0x3c8] sm:$0xff]
    %v150 = vld [vmem:[#allocation2 + $0x3d0] sm:$0xff]
    %v151 = vld [vmem:[#allocation2 + $0x3d8] sm:$0xff]
    %v152 = vld [vmem:[#allocation2 + $0x3e0] sm:$0xff]
    %v153 = vld [vmem:[#allocation2 + $0x3e8] sm:$0xff]
    %v154 = vld [vmem:[#allocation2 + $0x3f0] sm:$0xff]
    %v155 = vld [vmem:[#allocation2 + $0x3f8] sm:$0xff]
    %v156 = vld [vmem:[#allocation2 + $0x400] sm:$0xff]
    %v157 = vld [vmem:[#allocation2 + $0x408] sm:$0xff]
    %v158 = vld [vmem:[#allocation2 + $0x410] sm:$0xff]
    %v159 = vld [vmem:[#allocation2 + $0x418] sm:$0xff]
    %v160 = vld [vmem:[#allocation2 + $0x420] sm:$0xff]
    %v161 = vld [vmem:[#allocation2 + $0x428] sm:$0xff]
    %v162 = vld [vmem:[#allocation2 + $0x430] sm:$0xff]
    %v163 = vld [vmem:[#allocation2 + $0x438] sm:$0xff]
    %v164 = vld [vmem:[#allocation2 + $0x440] sm:$0xff]
    %v165 = vld [vmem:[#allocation2 + $0x448] sm:$0xff]
    %v166 = vld [vmem:[#allocation2 + $0x450] sm:$0xff]
    %v167 = vld [vmem:[#allocation2 + $0x458] sm:$0xff]
    %v168 = vld [vmem:[#allocation2 + $0x460] sm:$0xff]
    %v169 = vld [vmem:[#allocation2 + $0x468] sm:$0xff]
    %v170 = vld [vmem:[#allocation2 + $0x470] sm:$0xff]
    %v171 = vld [vmem:[#allocation2 + $0x478] sm:$0xff]
    %v172 = vld [vmem:[#allocation2 + $0x480] sm:$0xff]
    %v173 = vld [vmem:[#allocation2 + $0x488] sm:$0xff]
    %v174 = vld [vmem:[#allocation2 + $0x490] sm:$0xff]
    %v175 = vld [vmem:[#allocation2 + $0x498] sm:$0xff]
    %v176 = vld [vmem:[#allocation2 + $0x4a0] sm:$0xff]
    %v177 = vld [vmem:[#allocation2 + $0x4a8] sm:$0xff]
    %v178 = vld [vmem:[#allocation2 + $0x4b0] sm:$0xff]
    %v179 = vld [vmem:[#allocation2 + $0x4b8] sm:$0xff]
    %v180 = vld [vmem:[#allocation2 + $0x4c0] sm:$0xff]
    %v181 = vld [vmem:[#allocation2 + $0x4c8] sm:$0xff]
    %v182 = vld [vmem:[#allocation2 + $0x4d0] sm:$0xff]
    %v183 = vld [vmem:[#allocation2 + $0x4d8] sm:$0xff]
    %v184 = vld [vmem:[#allocation2 + $0x4e0] sm:$0xff]
    %v185 = vld [vmem:[#allocation2 + $0x4e8] sm:$0xff]
    %v186 = vld [vmem:[#allocation2 + $0x4f0] sm:$0xff]
    %v187 = vld [vmem:[#allocation2 + $0x4f8] sm:$0xff]
    %v188 = vld [vmem:[#allocation2 + $0x500] sm:$0xff]
    %v189 = vld [vmem:[#allocation2 + $0x508] sm:$0xff]
    %v190 = vld [vmem:[#allocation2 + $0x510] sm:$0xff]
    %v191 = vld [vmem:[#allocation2 + $0x518] sm:$0xff]
    %v192 = vld [vmem:[#allocation2 + $0x520] sm:$0xff]
    %v193 = vld [vmem:[#allocation2 + $0x528] sm:$0xff]
    %v194 = vld [vmem:[#allocation2 + $0x530] sm:$0xff]
    %v195 = vld [vmem:[#allocation2 + $0x538] sm:$0xff]
    %v196 = vld [vmem:[#allocation2 + $0x540] sm:$0xff]
    %v197 = vld [vmem:[#allocation2 + $0x548] sm:$0xff]
    %v198 = vld [vmem:[#allocation2 + $0x550] sm:$0xff]
    %v199 = vld [vmem:[#allocation2 + $0x558] sm:$0xff]
    %v200 = vld [vmem:[#allocation2 + $0x560] sm:$0xff]
    %v201 = vld [vmem:[#allocation2 + $0x568] sm:$0xff]
    %v202 = vld [vmem:[#allocation2 + $0x570] sm:$0xff]
    %v203 = vld [vmem:[#allocation2 + $0x578] sm:$0xff]
    %v204 = vld [vmem:[#allocation2 + $0x580] sm:$0xff]
    %v205 = vld [vmem:[#allocation2 + $0x588] sm:$0xff]
    %v206 = vld [vmem:[#allocation2 + $0x590] sm:$0xff]
    %v207 = vld [vmem:[#allocation2 + $0x598] sm:$0xff]
    %v208 = vld [vmem:[#allocation2 + $0x5a0] sm:$0xff]
    %v209 = vld [vmem:[#allocation2 + $0x5a8] sm:$0xff]
    %v210 = vld [vmem:[#allocation2 + $0x5b0] sm:$0xff]
    %v211 = vld [vmem:[#allocation2 + $0x5b8] sm:$0xff]
    %v212 = vld [vmem:[#allocation2 + $0x5c0] sm:$0xff]
    %v213 = vld [vmem:[#allocation2 + $0x5c8] sm:$0xff]
    %v214 = vld [vmem:[#allocation2 + $0x5d0] sm:$0xff]
    %v215 = vld [vmem:[#allocation2 + $0x5d8] sm:$0xff]
    %v216 = vld [vmem:[#allocation2 + $0x5e0] sm:$0xff]
    %v217 = vld [vmem:[#allocation2 + $0x5e8] sm:$0xff]
    %v218 = vld [vmem:[#allocation2 + $0x5f0] sm:$0xff]
    %v219 = vld [vmem:[#allocation2 + $0x5f8] sm:$0xff]
    %v220 = vld [vmem:[#allocation2 + $0x600] sm:$0xff]
    %v221 = vld [vmem:[#allocation2 + $0x608] sm:$0xff]
    %v222 = vld [vmem:[#allocation2 + $0x610] sm:$0xff]
    %v223 = vld [vmem:[#allocation2 + $0x618] sm:$0xff]
    %v224 = vld [vmem:[#allocation2 + $0x620] sm:$0xff]
    %v225 = vld [vmem:[#allocation2 + $0x628] sm:$0xff]
    %v226 = vld [vmem:[#allocation2 + $0x630] sm:$0xff]
    %v227 = vld [vmem:[#allocation2 + $0x638] sm:$0xff]
    %v228 = vld [vmem:[#allocation2 + $0x640] sm:$0xff]
    %v229 = vld [vmem:[#allocation2 + $0x648] sm:$0xff]
    %v230 = vld [vmem:[#allocation2 + $0x650] sm:$0xff]
    %v231 = vld [vmem:[#allocation2 + $0x658] sm:$0xff]
    %v232 = vld [vmem:[#allocation2 + $0x660] sm:$0xff]
    %v233 = vld [vmem:[#allocation2 + $0x668] sm:$0xff]
    %v234 = vld [vmem:[#allocation2 + $0x670] sm:$0xff]
    %v235 = vld [vmem:[#allocation2 + $0x678] sm:$0xff]
    %v236 = vld [vmem:[#allocation2 + $0x680] sm:$0xff]
    %v237 = vld [vmem:[#allocation2 + $0x688] sm:$0xff]
    %v238 = vld [vmem:[#allocation2 + $0x690] sm:$0xff]
    %v239 = vld [vmem:[#allocation2 + $0x698] sm:$0xff]
    %v240 = vld [vmem:[#allocation2 + $0x6a0] sm:$0xff]
    %v241 = vld [vmem:[#allocation2 + $0x6a8] sm:$0xff]
    %v242 = vld [vmem:[#allocation2 + $0x6b0] sm:$0xff]
    %v243 = vld [vmem:[#allocation2 + $0x6b8] sm:$0xff]
    %v244 = vld [vmem:[#allocation2 + $0x6c0] sm:$0xff]
    %v245 = vld [vmem:[#allocation2 + $0x6c8] sm:$0xff]
    %v246 = vld [vmem:[#allocation2 + $0x6d0] sm:$0xff]
    %v247 = vld [vmem:[#allocation2 + $0x6d8] sm:$0xff]
    %v248 = vld [vmem:[#allocation2 + $0x6e0] sm:$0xff]
    %v249 = vld [vmem:[#allocation2 + $0x6e8] sm:$0xff]
    %v250 = vld [vmem:[#allocation2 + $0x6f0] sm:$0xff]
    %v251 = vld [vmem:[#allocation2 + $0x6f8] sm:$0xff]
    %v252 = vld [vmem:[#allocation2 + $0x700] sm:$0xff]
    %v253 = vld [vmem:[#allocation2 + $0x708] sm:$0xff]
    %v254 = vld [vmem:[#allocation2 + $0x710] sm:$0xff]
    %v255 = vld [vmem:[#allocation2 + $0x718] sm:$0xff]
    %v256 = vld [vmem:[#allocation2 + $0x720] sm:$0xff]
    %v257 = vld [vmem:[#allocation2 + $0x728] sm:$0xff]
    %v258 = vld [vmem:[#allocation2 + $0x730] sm:$0xff]
    %v259 = vld [vmem:[#allocation2 + $0x738] sm:$0xff]
    %v260 = vld [vmem:[#allocation2 + $0x740] sm:$0xff]
    %v261 = vld [vmem:[#allocation2 + $0x748] sm:$0xff]
    %v262 = vld [vmem:[#allocation2 + $0x750] sm:$0xff]
    %v263 = vld [vmem:[#allocation2 + $0x758] sm:$0xff]
    %v264 = vld [vmem:[#allocation2 + $0x760] sm:$0xff]
    %v265 = vld [vmem:[#allocation2 + $0x768] sm:$0xff]
    %v266 = vld [vmem:[#allocation2 + $0x770] sm:$0xff]
    %v267 = vld [vmem:[#allocation2 + $0x778] sm:$0xff]
    %v268 = vld [vmem:[#allocation2 + $0x780] sm:$0xff]
    %v269 = vld [vmem:[#allocation2 + $0x788] sm:$0xff]
    %v270 = vld [vmem:[#allocation2 + $0x790] sm:$0xff]
    %v271 = vld [vmem:[#allocation2 + $0x798] sm:$0xff]
    %v272 = vld [vmem:[#allocation2 + $0x7a0] sm:$0xff]
    %v273 = vld [vmem:[#allocation2 + $0x7a8] sm:$0xff]
    %v274 = vld [vmem:[#allocation2 + $0x7b0] sm:$0xff]
    %v275 = vld [vmem:[#allocation2 + $0x7b8] sm:$0xff]
    %v276 = vld [vmem:[#allocation2 + $0x7c0] sm:$0xff]
    %v277 = vld [vmem:[#allocation2 + $0x7c8] sm:$0xff]
    %v278 = vld [vmem:[#allocation2 + $0x7d0] sm:$0xff]
    %v279 = vld [vmem:[#allocation2 + $0x7d8] sm:$0xff]
    %v280 = vld [vmem:[#allocation2 + $0x7e0] sm:$0xff]
    %v281 = vld [vmem:[#allocation2 + $0x7e8] sm:$0xff]
    %v282 = vld [vmem:[#allocation2 + $0x7f0] sm:$0xff]
    %v283 = vld [vmem:[#allocation2 + $0x7f8] sm:$0xff]
    %v284 = vld [vmem:[#allocation2 + $0x800] sm:$0xff]
    %v285 = vld [vmem:[#allocation2 + $0x808] sm:$0xff]
    %v286 = vld [vmem:[#allocation2 + $0x810] sm:$0xff]
    %v287 = vld [vmem:[#allocation2 + $0x818] sm:$0xff]
    %v288 = vld [vmem:[#allocation2 + $0x820] sm:$0xff]
    %v289 = vld [vmem:[#allocation2 + $0x828] sm:$0xff]
    %v290 = vld [vmem:[#allocation2 + $0x830] sm:$0xff]
    %v291 = vld [vmem:[#allocation2 + $0x838] sm:$0xff]
    %v292 = vld [vmem:[#allocation2 + $0x840] sm:$0xff]
    %v293 = vld [vmem:[#allocation2 + $0x848] sm:$0xff]
    %v294 = vld [vmem:[#allocation2 + $0x850] sm:$0xff]
    %v295 = vld [vmem:[#allocation2 + $0x858] sm:$0xff]
    %v296 = vld [vmem:[#allocation2 + $0x860] sm:$0xff]
    %v297 = vld [vmem:[#allocation2 + $0x868] sm:$0xff]
    %v298 = vld [vmem:[#allocation2 + $0x870] sm:$0xff]
    %v299 = vld [vmem:[#allocation2 + $0x878] sm:$0xff]
    %v300 = vld [vmem:[#allocation2 + $0x880] sm:$0xff]
    %v301 = vld [vmem:[#allocation2 + $0x888] sm:$0xff]
    %v302 = vld [vmem:[#allocation2 + $0x890] sm:$0xff]
    %v303 = vld [vmem:[#allocation2 + $0x898] sm:$0xff]
    %v304 = vld [vmem:[#allocation2 + $0x8a0] sm:$0xff]
    %v305 = vld [vmem:[#allocation2 + $0x8a8] sm:$0xff]
    %v306 = vld [vmem:[#allocation2 + $0x8b0] sm:$0xff]
    %v307 = vld [vmem:[#allocation2 + $0x8b8] sm:$0xff]
    %v308 = vld [vmem:[#allocation2 + $0x8c0] sm:$0xff]
    %v309 = vld [vmem:[#allocation2 + $0x8c8] sm:$0xff]
    %v310 = vld [vmem:[#allocation2 + $0x8d0] sm:$0xff]
    %v311 = vld [vmem:[#allocation2 + $0x8d8] sm:$0xff]
    %v312 = vld [vmem:[#allocation2 + $0x8e0] sm:$0xff]
    %v313 = vld [vmem:[#allocation2 + $0x8e8] sm:$0xff]
    %v314 = vld [vmem:[#allocation2 + $0x8f0] sm:$0xff]
    %v315 = vld [vmem:[#allocation2 + $0x8f8] sm:$0xff]
    %v316 = vld [vmem:[%s1] sm:$0xff]
    %v317 = vld [vmem:[%s1 + $0x8] sm:$0xff]
    %v318 = vld [vmem:[%s1 + $0x10] sm:$0xff]
    %v319 = vld [vmem:[%s1 + $0x18] sm:$0xff]
    %v320 = vld [vmem:[%s1 + $0x20] sm:$0xff]
    %v321 = vld [vmem:[%s1 + $0x28] sm:$0xff]
    %v322 = vld [vmem:[%s1 + $0x30] sm:$0xff]
    %v323 = vld [vmem:[%s1 + $0x38] sm:$0xff]
    %v324 = vld [vmem:[%s1 + $0x40] sm:$0xff]
    %v325 = vld [vmem:[%s1 + $0x48] sm:$0xff]
    %v326 = vld [vmem:[%s1 + $0x50] sm:$0xff]
    %v327 = vld [vmem:[%s1 + $0x58] sm:$0xff]
    %v328 = vld [vmem:[%s1 + $0x60] sm:$0xff]
    %v329 = vld [vmem:[%s1 + $0x68] sm:$0xff]
    %v330 = vld [vmem:[%s1 + $0x70] sm:$0xff]
    %v331 = vld [vmem:[%s1 + $0x78] sm:$0xff]
    %v332 = vld [vmem:[%s1 + $0x80] sm:$0xff]
    %v333 = vld [vmem:[%s1 + $0x88] sm:$0xff]
    %v334 = vld [vmem:[%s1 + $0x90] sm:$0xff]
    %v335 = vld [vmem:[%s1 + $0x98] sm:$0xff]
    %v336 = vld [vmem:[%s1 + $0xa0] sm:$0xff]
    %v337 = vld [vmem:[%s1 + $0xa8] sm:$0xff]
    %v338 = vld [vmem:[%s1 + $0xb0] sm:$0xff]
    %v339 = vld [vmem:[%s1 + $0xb8] sm:$0xff]
    %v340 = vld [vmem:[%s1 + $0xc0] sm:$0xff]
    %v341 = vld [vmem:[%s1 + $0xc8] sm:$0xff]
    %v342 = vld [vmem:[%s1 + $0xd0] sm:$0xff]
    %v343 = vld [vmem:[%s1 + $0xd8] sm:$0xff]
    %v344 = vld [vmem:[%s1 + $0xe0] sm:$0xff]
    %v345 = vld [vmem:[%s1 + $0xe8] sm:$0xff]
    %v346 = vld [vmem:[%s1 + $0xf0] sm:$0xff]
    %v347 = vld [vmem:[%s1 + $0xf8] sm:$0xff]
    %v348 = vld [vmem:[%s1 + $0x100] sm:$0xff]
    %v349 = vld [vmem:[%s1 + $0x108] sm:$0xff]
    %v350 = vld [vmem:[%s1 + $0x110] sm:$0xff]
    %v351 = vld [vmem:[%s1 + $0x118] sm:$0xff]
    %v352 = vld [vmem:[%s1 + $0x120] sm:$0xff]
    %v353 = vld [vmem:[%s1 + $0x128] sm:$0xff]
    %v354 = vld [vmem:[%s1 + $0x130] sm:$0xff]
    %v355 = vld [vmem:[%s1 + $0x138] sm:$0xff]
    %v356 = vld [vmem:[%s1 + $0x140] sm:$0xff]
    %v357 = vld [vmem:[%s1 + $0x148] sm:$0xff]
    %v358 = vld [vmem:[%s1 + $0x150] sm:$0xff]
    %v359 = vld [vmem:[%s1 + $0x158] sm:$0xff]
    %v360 = vld [vmem:[%s1 + $0x160] sm:$0xff]
    %v361 = vld [vmem:[%s1 + $0x168] sm:$0xff]
    %v362 = vld [vmem:[%s1 + $0x170] sm:$0xff]
    %v363 = vld [vmem:[%s1 + $0x178] sm:$0xff]
    %v364 = vld [vmem:[%s1 + $0x180] sm:$0xff]
    %v365 = vld [vmem:[%s1 + $0x188] sm:$0xff]
    %v366 = vld [vmem:[%s1 + $0x190] sm:$0xff]
    %v367 = vld [vmem:[%s1 + $0x198] sm:$0xff]
    %v368 = vld [vmem:[%s1 + $0x1a0] sm:$0xff]
    %v369 = vld [vmem:[%s1 + $0x1a8] sm:$0xff]
    %v370 = vld [vmem:[%s1 + $0x1b0] sm:$0xff]
    %v371 = vld [vmem:[%s1 + $0x1b8] sm:$0xff]
    %v372 = vld [vmem:[%s1 + $0x1c0] sm:$0xff]
    %v373 = vld [vmem:[%s1 + $0x1c8] sm:$0xff]
    %v374 = vld [vmem:[%s1 + $0x1d0] sm:$0xff]
    %v375 = vld [vmem:[%s1 + $0x1d8] sm:$0xff]
    %v376 = vld [vmem:[%s1 + $0x1e0] sm:$0xff]
    %v377 = vld [vmem:[%s1 + $0x1e8] sm:$0xff]
    %v378 = vld [vmem:[%s1 + $0x1f0] sm:$0xff]
    %v379 = vld [vmem:[%s1 + $0x1f8] sm:$0xff]
    %v380 = vld [vmem:[%s1 + $0x200] sm:$0xff]
    %v381 = vld [vmem:[%s1 + $0x208] sm:$0xff]
    %v382 = vld [vmem:[%s1 + $0x210] sm:$0xff]
    %v383 = vld [vmem:[%s1 + $0x218] sm:$0xff]
    %v384 = vld [vmem:[%s1 + $0x220] sm:$0xff]
    %v385 = vld [vmem:[%s1 + $0x228] sm:$0xff]
    %v386 = vld [vmem:[%s1 + $0x230] sm:$0xff]
    %v387 = vld [vmem:[%s1 + $0x238] sm:$0xff]
    %v388 = vld [vmem:[%s1 + $0x240] sm:$0xff]
    %v389 = vld [vmem:[%s1 + $0x248] sm:$0xff]
    %v390 = vld [vmem:[%s1 + $0x250] sm:$0xff]
    %v391 = vld [vmem:[%s1 + $0x258] sm:$0xff]
    %v392 = vld [vmem:[%s1 + $0x260] sm:$0xff]
    %v393 = vld [vmem:[%s1 + $0x268] sm:$0xff]
    %v394 = vld [vmem:[%s1 + $0x270] sm:$0xff]
    %v395 = vld [vmem:[%s1 + $0x278] sm:$0xff]
    %v396 = vld [vmem:[%s1 + $0x280] sm:$0xff]
    %v397 = vld [vmem:[%s1 + $0x288] sm:$0xff]
    %v398 = vld [vmem:[%s1 + $0x290] sm:$0xff]
    %v399 = vld [vmem:[%s1 + $0x298] sm:$0xff]
    %v400 = vld [vmem:[%s1 + $0x2a0] sm:$0xff]
    %v401 = vld [vmem:[%s1 + $0x2a8] sm:$0xff]
    %v402 = vld [vmem:[%s1 + $0x2b0] sm:$0xff]
    %v403 = vld [vmem:[%s1 + $0x2b8] sm:$0xff]
    %v404 = vld [vmem:[%s1 + $0x2c0] sm:$0xff]
    %v405 = vld [vmem:[%s1 + $0x2c8] sm:$0xff]
    %v406 = vld [vmem:[%s1 + $0x2d0] sm:$0xff]
    %v407 = vld [vmem:[%s1 + $0x2d8] sm:$0xff]
    %v408 = vld [vmem:[%s1 + $0x2e0] sm:$0xff]
    %v409 = vld [vmem:[%s1 + $0x2e8] sm:$0xff]
    %v410 = vld [vmem:[%s1 + $0x2f0] sm:$0xff]
    %v411 = vld [vmem:[%s1 + $0x2f8] sm:$0xff]
    %v412 = vld [vmem:[%s1 + $0x300] sm:$0xff]
    %v413 = vld [vmem:[%s1 + $0x308] sm:$0xff]
    %v414 = vld [vmem:[%s1 + $0x310] sm:$0xff]
    %v415 = vld [vmem:[%s1 + $0x318] sm:$0xff]
    %v416 = vld [vmem:[%s1 + $0x320] sm:$0xff]
    %v417 = vld [vmem:[%s1 + $0x328] sm:$0xff]
    %v418 = vld [vmem:[%s1 + $0x330] sm:$0xff]
    %v419 = vld [vmem:[%s1 + $0x338] sm:$0xff]
    %v420 = vld [vmem:[%s1 + $0x340] sm:$0xff]
    %v421 = vld [vmem:[%s1 + $0x348] sm:$0xff]
    %v422 = vld [vmem:[%s1 + $0x350] sm:$0xff]
    %v423 = vld [vmem:[%s1 + $0x358] sm:$0xff]
    %v424 = vld [vmem:[%s1 + $0x360] sm:$0xff]
    %v425 = vld [vmem:[%s1 + $0x368] sm:$0xff]
    %v426 = vld [vmem:[%s1 + $0x370] sm:$0xff]
    %v427 = vld [vmem:[%s1 + $0x378] sm:$0xff]
    %v428 = vld [vmem:[%s1 + $0x380] sm:$0xff]
    %v429 = vld [vmem:[%s1 + $0x388] sm:$0xff]
    %v430 = vld [vmem:[%s1 + $0x390] sm:$0xff]
    %v431 = vld [vmem:[%s1 + $0x398] sm:$0xff]
    %v432 = vld [vmem:[%s1 + $0x3a0] sm:$0xff]
    %v433 = vld [vmem:[%s1 + $0x3a8] sm:$0xff]
    %v434 = vld [vmem:[%s1 + $0x3b0] sm:$0xff]
    %v435 = vld [vmem:[%s1 + $0x3b8] sm:$0xff]
    %v436 = vld [vmem:[%s1 + $0x3c0] sm:$0xff]
    %v437 = vld [vmem:[%s1 + $0x3c8] sm:$0xff]
    %v438 = vld [vmem:[%s1 + $0x3d0] sm:$0xff]
    %v439 = vld [vmem:[%s1 + $0x3d8] sm:$0xff]
    %v440 = vld [vmem:[%s1 + $0x3e0] sm:$0xff]
    %v441 = vld [vmem:[%s1 + $0x3e8] sm:$0xff]
    %v442 = vld [vmem:[%s1 + $0x3f0] sm:$0xff]
    %v443 = vld [vmem:[%s1 + $0x3f8] sm:$0xff]
    %v444 = vld [vmem:[%s1 + $0x400] sm:$0xff]
    %v445 = vld [vmem:[%s1 + $0x408] sm:$0xff]
    %v446 = vld [vmem:[%s1 + $0x410] sm:$0xff]
    %v447 = vld [vmem:[%s1 + $0x418] sm:$0xff]
    %v448 = vld [vmem:[%s1 + $0x420] sm:$0xff]
    %v449 = vld [vmem:[%s1 + $0x428] sm:$0xff]
    %v450 = vld [vmem:[%s1 + $0x430] sm:$0xff]
    %v451 = vld [vmem:[%s1 + $0x438] sm:$0xff]
    %v452 = vld [vmem:[%s1 + $0x440] sm:$0xff]
    %v453 = vld [vmem:[%s1 + $0x448] sm:$0xff]
    %v454 = vld [vmem:[%s1 + $0x450] sm:$0xff]
    %v455 = vld [vmem:[%s1 + $0x458] sm:$0xff]
    %v456 = vld [vmem:[%s1 + $0x460] sm:$0xff]
    %v457 = vld [vmem:[%s1 + $0x468] sm:$0xff]
    %v458 = vld [vmem:[%s1 + $0x470] sm:$0xff]
    %v459 = vld [vmem:[%s1 + $0x478] sm:$0xff]
    %v460 = vld [vmem:[%s1 + $0x480] sm:$0xff]
    %v461 = vld [vmem:[%s1 + $0x488] sm:$0xff]
    %v462 = vld [vmem:[%s1 + $0x490] sm:$0xff]
    %v463 = vld [vmem:[%s1 + $0x498] sm:$0xff]
    %v464 = vld [vmem:[%s1 + $0x4a0] sm:$0xff]
    %v465 = vld [vmem:[%s1 + $0x4a8] sm:$0xff]
    %v466 = vld [vmem:[%s1 + $0x4b0] sm:$0xff]
    %v467 = vld [vmem:[%s1 + $0x4b8] sm:$0xff]
    %v468 = vld [vmem:[%s1 + $0x4c0] sm:$0xff]
    %v469 = vld [vmem:[%s1 + $0x4c8] sm:$0xff]
    %v470 = vld [vmem:[%s1 + $0x4d0] sm:$0xff]
    %v471 = vld [vmem:[%s1 + $0x4d8] sm:$0xff]
    %v472 = vld [vmem:[%s1 + $0x4e0] sm:$0xff]
    %v473 = vld [vmem:[%s1 + $0x4e8] sm:$0xff]
    %v474 = vld [vmem:[%s1 + $0x4f0] sm:$0xff]
    %v475 = vld [vmem:[%s1 + $0x4f8] sm:$0xff]
    %v476 = vld [vmem:[%s1 + $0x500] sm:$0xff]
    %v477 = vld [vmem:[%s1 + $0x508] sm:$0xff]
    %v478 = vld [vmem:[%s1 + $0x510] sm:$0xff]
    %v479 = vld [vmem:[%s1 + $0x518] sm:$0xff]
    %v480 = vld [vmem:[%s1 + $0x520] sm:$0xff]
    %v481 = vld [vmem:[%s1 + $0x528] sm:$0xff]
    %v482 = vld [vmem:[%s1 + $0x530] sm:$0xff]
    %v483 = vld [vmem:[%s1 + $0x538] sm:$0xff]
    %v484 = vld [vmem:[%s1 + $0x540] sm:$0xff]
    %v485 = vld [vmem:[%s1 + $0x548] sm:$0xff]
    %v486 = vld [vmem:[%s1 + $0x550] sm:$0xff]
    %v487 = vld [vmem:[%s1 + $0x558] sm:$0xff]
    %v488 = vld [vmem:[%s1 + $0x560] sm:$0xff]
    %v489 = vld [vmem:[%s1 + $0x568] sm:$0xff]
    %v490 = vld [vmem:[%s1 + $0x570] sm:$0xff]
    %v491 = vld [vmem:[%s1 + $0x578] sm:$0xff]
    %v492 = vld [vmem:[%s1 + $0x580] sm:$0xff]
    %v493 = vld [vmem:[%s1 + $0x588] sm:$0xff]
    %v494 = vld [vmem:[%s1 + $0x590] sm:$0xff]
    %v495 = vld [vmem:[%s1 + $0x598] sm:$0xff]
    %v496 = vld [vmem:[%s1 + $0x5a0] sm:$0xff]
    %v497 = vld [vmem:[%s1 + $0x5a8] sm:$0xff]
    %v498 = vld [vmem:[%s1 + $0x5b0] sm:$0xff]
    %v499 = vld [vmem:[%s1 + $0x5b8] sm:$0xff]
    %v500 = vld [vmem:[%s1 + $0x5c0] sm:$0xff]
    %v501 = vld [vmem:[%s1 + $0x5c8] sm:$0xff]
    %v502 = vld [vmem:[%s1 + $0x5d0] sm:$0xff]
    %v503 = vld [vmem:[%s1 + $0x5d8] sm:$0xff]
    %v504 = vld [vmem:[%s1 + $0x5e0] sm:$0xff]
    %v505 = vld [vmem:[%s1 + $0x5e8] sm:$0xff]
    %v506 = vld [vmem:[%s1 + $0x5f0] sm:$0xff]
    %v507 = vld [vmem:[%s1 + $0x5f8] sm:$0xff]
    %v508 = vld [vmem:[%s1 + $0x600] sm:$0xff]
    %v509 = vld [vmem:[%s1 + $0x608] sm:$0xff]
    %v510 = vld [vmem:[%s1 + $0x610] sm:$0xff]
    %v511 = vld [vmem:[%s1 + $0x618] sm:$0xff]
    %v512 = vld [vmem:[%s1 + $0x620] sm:$0xff]
    %v513 = vld [vmem:[%s1 + $0x628] sm:$0xff]
    %v514 = vld [vmem:[%s1 + $0x630] sm:$0xff]
    %v515 = vld [vmem:[%s1 + $0x638] sm:$0xff]
    %v516 = vld [vmem:[%s1 + $0x640] sm:$0xff]
    %v517 = vld [vmem:[%s1 + $0x648] sm:$0xff]
    %v518 = vld [vmem:[%s1 + $0x650] sm:$0xff]
    %v519 = vld [vmem:[%s1 + $0x658] sm:$0xff]
    %v520 = vld [vmem:[%s1 + $0x660] sm:$0xff]
    %v521 = vld [vmem:[%s1 + $0x668] sm:$0xff]
    %v522 = vld [vmem:[%s1 + $0x670] sm:$0xff]
    %v523 = vld [vmem:[%s1 + $0x678] sm:$0xff]
    %v524 = vld [vmem:[%s1 + $0x680] sm:$0xff]
    %v525 = vld [vmem:[%s1 + $0x688] sm:$0xff]
    %v526 = vld [vmem:[%s1 + $0x690] sm:$0xff]
    %v527 = vld [vmem:[%s1 + $0x698] sm:$0xff]
    %v528 = vld [vmem:[%s1 + $0x6a0] sm:$0xff]
    %v529 = vld [vmem:[%s1 + $0x6a8] sm:$0xff]
    %v530 = vld [vmem:[%s1 + $0x6b0] sm:$0xff]
    %v531 = vld [vmem:[%s1 + $0x6b8] sm:$0xff]
    %v532 = vld [vmem:[%s1 + $0x6c0] sm:$0xff]
    %v533 = vld [vmem:[%s1 + $0x6c8] sm:$0xff]
    %v534 = vld [vmem:[%s1 + $0x6d0] sm:$0xff]
    %v535 = vld [vmem:[%s1 + $0x6d8] sm:$0xff]
    %v536 = vld [vmem:[%s1 + $0x6e0] sm:$0xff]
    %v537 = vld [vmem:[%s1 + $0x6e8] sm:$0xff]
    %v538 = vld [vmem:[%s1 + $0x6f0] sm:$0xff]
    %v539 = vld [vmem:[%s1 + $0x6f8] sm:$0xff]
    %v540 = vld [vmem:[%s1 + $0x700] sm:$0xff]
    %v541 = vld [vmem:[%s1 + $0x708] sm:$0xff]
    %v542 = vld [vmem:[%s1 + $0x710] sm:$0xff]
    %v543 = vld [vmem:[%s1 + $0x718] sm:$0xff]
    %v544 = vld [vmem:[%s1 + $0x720] sm:$0xff]
    %v545 = vld [vmem:[%s1 + $0x728] sm:$0xff]
    %v546 = vld [vmem:[%s1 + $0x730] sm:$0xff]
    %v547 = vld [vmem:[%s1 + $0x738] sm:$0xff]
    %v548 = vld [vmem:[%s1 + $0x740] sm:$0xff]
    %v549 = vld [vmem:[%s1 + $0x748] sm:$0xff]
    %v550 = vld [vmem:[%s1 + $0x750] sm:$0xff]
    %v551 = vld [vmem:[%s1 + $0x758] sm:$0xff]
    %v552 = vld [vmem:[%s1 + $0x760] sm:$0xff]
    %v553 = vld [vmem:[%s1 + $0x768] sm:$0xff]
    %v554 = vld [vmem:[%s1 + $0x770] sm:$0xff]
    %v555 = vld [vmem:[%s1 + $0x778] sm:$0xff]
    %v556 = vld [vmem:[%s1 + $0x780] sm:$0xff]
    %v557 = vld [vmem:[%s1 + $0x788] sm:$0xff]
    %v558 = vld [vmem:[%s1 + $0x790] sm:$0xff]
    %v559 = vld [vmem:[%s1 + $0x798] sm:$0xff]
    %v560 = vld [vmem:[%s1 + $0x7a0] sm:$0xff]
    %v561 = vld [vmem:[%s1 + $0x7a8] sm:$0xff]
    %v562 = vld [vmem:[%s1 + $0x7b0] sm:$0xff]
    %v563 = vld [vmem:[%s1 + $0x7b8] sm:$0xff]
    %v564 = vld [vmem:[%s1 + $0x7c0] sm:$0xff]
    %v565 = vld [vmem:[%s1 + $0x7c8] sm:$0xff]
    %v566 = vld [vmem:[%s1 + $0x7d0] sm:$0xff]
    %v567 = vld [vmem:[%s1 + $0x7d8] sm:$0xff]
    %v568 = vld [vmem:[%s1 + $0x7e0] sm:$0xff]
    %v569 = vld [vmem:[%s1 + $0x7e8] sm:$0xff]
    %v570 = vld [vmem:[%s1 + $0x7f0] sm:$0xff]
    %v571 = vld [vmem:[%s1 + $0x7f8] sm:$0xff]
    %v572 = vld [vmem:[%s1 + $0x800] sm:$0xff]
    %v573 = vld [vmem:[%s1 + $0x808] sm:$0xff]
    %v574 = vld [vmem:[%s1 + $0x810] sm:$0xff]
    %v575 = vld [vmem:[%s1 + $0x818] sm:$0xff]
    %v576 = vld [vmem:[%s1 + $0x820] sm:$0xff]
    %v577 = vld [vmem:[%s1 + $0x828] sm:$0xff]
    %v578 = vld [vmem:[%s1 + $0x830] sm:$0xff]
    %v579 = vld [vmem:[%s1 + $0x838] sm:$0xff]
    %v580 = vld [vmem:[%s1 + $0x840] sm:$0xff]
    %v581 = vld [vmem:[%s1 + $0x848] sm:$0xff]
    %v582 = vld [vmem:[%s1 + $0x850] sm:$0xff]
    %v583 = vld [vmem:[%s1 + $0x858] sm:$0xff]
    %v584 = vld [vmem:[%s1 + $0x860] sm:$0xff]
    %v585 = vld [vmem:[%s1 + $0x868] sm:$0xff]
    %v586 = vld [vmem:[%s1 + $0x870] sm:$0xff]
    %v587 = vld [vmem:[%s1 + $0x878] sm:$0xff]
    %v588 = vld [vmem:[%s1 + $0x880] sm:$0xff]
    %v589 = vld [vmem:[%s1 + $0x888] sm:$0xff]
    %v590 = vld [vmem:[%s1 + $0x890] sm:$0xff]
    %v591 = vld [vmem:[%s1 + $0x898] sm:$0xff]
    %v592 = vld [vmem:[%s1 + $0x8a0] sm:$0xff]
    %v593 = vld [vmem:[%s1 + $0x8a8] sm:$0xff]
    %v594 = vld [vmem:[%s1 + $0x8b0] sm:$0xff]
    %v595 = vld [vmem:[%s1 + $0x8b8] sm:$0xff]
    %v596 = vld [vmem:[%s1 + $0x8c0] sm:$0xff]
    %v597 = vld [vmem:[%s1 + $0x8c8] sm:$0xff]
    %v598 = vld [vmem:[%s1 + $0x8d0] sm:$0xff]
    %v599 = vld [vmem:[%s1 + $0x8d8] sm:$0xff]
    %v600 = vld [vmem:[%s1 + $0x8e0] sm:$0xff]
    %v601 = vld [vmem:[%s1 + $0x8e8] sm:$0xff]
    %v602 = vld [vmem:[%s1 + $0x8f0] sm:$0xff]
    %v603 = vld [vmem:[%s1 + $0x8f8] sm:$0xff]
    %v604 = vadd.f32 %v28, %v316
    %v605 = vadd.f32 %v29, %v317
    %v606 = vadd.f32 %v30, %v318
    %v607 = vadd.f32 %v31, %v319
    %v608 = vadd.f32 %v32, %v320
    %v609 = vadd.f32 %v33, %v321
    %v610 = vadd.f32 %v34, %v322
    %v611 = vadd.f32 %v35, %v323
    %v612 = vadd.f32 %v36, %v324
    %v613 = vadd.f32 %v37, %v325
    %v614 = vadd.f32 %v38, %v326
    %v615 = vadd.f32 %v39, %v327
    %v616 = vadd.f32 %v40, %v328
    %v617 = vadd.f32 %v41, %v329
    %v618 = vadd.f32 %v42, %v330
    %v619 = vadd.f32 %v43, %v331
    %v620 = vadd.f32 %v44, %v332
    %v621 = vadd.f32 %v45, %v333
    %v622 = vadd.f32 %v46, %v334
    %v623 = vadd.f32 %v47, %v335
    %v624 = vadd.f32 %v48, %v336
    %v625 = vadd.f32 %v49, %v337
    %v626 = vadd.f32 %v50, %v338
    %v627 = vadd.f32 %v51, %v339
    %v628 = vadd.f32 %v52, %v340
    %v629 = vadd.f32 %v53, %v341
    %v630 = vadd.f32 %v54, %v342
    %v631 = vadd.f32 %v55, %v343
    %v632 = vadd.f32 %v56, %v344
    %v633 = vadd.f32 %v57, %v345
    %v634 = vadd.f32 %v58, %v346
    %v635 = vadd.f32 %v59, %v347
    %v636 = vadd.f32 %v60, %v348
    %v637 = vadd.f32 %v61, %v349
    %v638 = vadd.f32 %v62, %v350
    %v639 = vadd.f32 %v63, %v351
    %v640 = vadd.f32 %v64, %v352
    %v641 = vadd.f32 %v65, %v353
    %v642 = vadd.f32 %v66, %v354
    %v643 = vadd.f32 %v67, %v355
    %v644 = vadd.f32 %v68, %v356
    %v645 = vadd.f32 %v69, %v357
    %v646 = vadd.f32 %v70, %v358
    %v647 = vadd.f32 %v71, %v359
    %v648 = vadd.f32 %v72, %v360
    %v649 = vadd.f32 %v73, %v361
    %v650 = vadd.f32 %v74, %v362
    %v651 = vadd.f32 %v75, %v363
    %v652 = vadd.f32 %v76, %v364
    %v653 = vadd.f32 %v77, %v365
    %v654 = vadd.f32 %v78, %v366
    %v655 = vadd.f32 %v79, %v367
    %v656 = vadd.f32 %v80, %v368
    %v657 = vadd.f32 %v81, %v369
    %v658 = vadd.f32 %v82, %v370
    %v659 = vadd.f32 %v83, %v371
    %v660 = vadd.f32 %v84, %v372
    %v661 = vadd.f32 %v85, %v373
    %v662 = vadd.f32 %v86, %v374
    %v663 = vadd.f32 %v87, %v375
    %v664 = vadd.f32 %v88, %v376
    %v665 = vadd.f32 %v89, %v377
    %v666 = vadd.f32 %v90, %v378
    %v667 = vadd.f32 %v91, %v379
    %v668 = vadd.f32 %v92, %v380
    %v669 = vadd.f32 %v93, %v381
    %v670 = vadd.f32 %v94, %v382
    %v671 = vadd.f32 %v95, %v383
    %v672 = vadd.f32 %v96, %v384
    %v673 = vadd.f32 %v97, %v385
    %v674 = vadd.f32 %v98, %v386
    %v675 = vadd.f32 %v99, %v387
    %v676 = vadd.f32 %v100, %v388
    %v677 = vadd.f32 %v101, %v389
    %v678 = vadd.f32 %v102, %v390
    %v679 = vadd.f32 %v103, %v391
    %v680 = vadd.f32 %v104, %v392
    %v681 = vadd.f32 %v105, %v393
    %v682 = vadd.f32 %v106, %v394
    %v683 = vadd.f32 %v107, %v395
    %v684 = vadd.f32 %v108, %v396
    %v685 = vadd.f32 %v109, %v397
    %v686 = vadd.f32 %v110, %v398
    %v687 = vadd.f32 %v111, %v399
    %v688 = vadd.f32 %v112, %v400
    %v689 = vadd.f32 %v113, %v401
    %v690 = vadd.f32 %v114, %v402
    %v691 = vadd.f32 %v115, %v403
    %v692 = vadd.f32 %v116, %v404
    %v693 = vadd.f32 %v117, %v405
    %v694 = vadd.f32 %v118, %v406
    %v695 = vadd.f32 %v119, %v407
    %v696 = vadd.f32 %v120, %v408
    %v697 = vadd.f32 %v121, %v409
    %v698 = vadd.f32 %v122, %v410
    %v699 = vadd.f32 %v123, %v411
    %v700 = vadd.f32 %v124, %v412
    %v701 = vadd.f32 %v125, %v413
    %v702 = vadd.f32 %v126, %v414
    %v703 = vadd.f32 %v127, %v415
    %v704 = vadd.f32 %v128, %v416
    %v705 = vadd.f32 %v129, %v417
    %v706 = vadd.f32 %v130, %v418
    %v707 = vadd.f32 %v131, %v419
    %v708 = vadd.f32 %v132, %v420
    %v709 = vadd.f32 %v133, %v421
    %v710 = vadd.f32 %v134, %v422
    %v711 = vadd.f32 %v135, %v423
    %v712 = vadd.f32 %v136, %v424
    %v713 = vadd.f32 %v137, %v425
    %v714 = vadd.f32 %v138, %v426
    %v715 = vadd.f32 %v139, %v427
    %v716 = vadd.f32 %v140, %v428
    %v717 = vadd.f32 %v141, %v429
    %v718 = vadd.f32 %v142, %v430
    %v719 = vadd.f32 %v143, %v431
    %v720 = vadd.f32 %v144, %v432
    %v721 = vadd.f32 %v145, %v433
    %v722 = vadd.f32 %v146, %v434
    %v723 = vadd.f32 %v147, %v435
    %v724 = vadd.f32 %v148, %v436
    %v725 = vadd.f32 %v149, %v437
    %v726 = vadd.f32 %v150, %v438
    %v727 = vadd.f32 %v151, %v439
    %v728 = vadd.f32 %v152, %v440
    %v729 = vadd.f32 %v153, %v441
    %v730 = vadd.f32 %v154, %v442
    %v731 = vadd.f32 %v155, %v443
    %v732 = vadd.f32 %v156, %v444
    %v733 = vadd.f32 %v157, %v445
    %v734 = vadd.f32 %v158, %v446
    %v735 = vadd.f32 %v159, %v447
    %v736 = vadd.f32 %v160, %v448
    %v737 = vadd.f32 %v161, %v449
    %v738 = vadd.f32 %v162, %v450
    %v739 = vadd.f32 %v163, %v451
    %v740 = vadd.f32 %v164, %v452
    %v741 = vadd.f32 %v165, %v453
    %v742 = vadd.f32 %v166, %v454
    %v743 = vadd.f32 %v167, %v455
    %v744 = vadd.f32 %v168, %v456
    %v745 = vadd.f32 %v169, %v457
    %v746 = vadd.f32 %v170, %v458
    %v747 = vadd.f32 %v171, %v459
    %v748 = vadd.f32 %v172, %v460
    %v749 = vadd.f32 %v173, %v461
    %v750 = vadd.f32 %v174, %v462
    %v751 = vadd.f32 %v175, %v463
    %v752 = vadd.f32 %v176, %v464
    %v753 = vadd.f32 %v177, %v465
    %v754 = vadd.f32 %v178, %v466
    %v755 = vadd.f32 %v179, %v467
    %v756 = vadd.f32 %v180, %v468
    %v757 = vadd.f32 %v181, %v469
    %v758 = vadd.f32 %v182, %v470
    %v759 = vadd.f32 %v183, %v471
    %v760 = vadd.f32 %v184, %v472
    %v761 = vadd.f32 %v185, %v473
    %v762 = vadd.f32 %v186, %v474
    %v763 = vadd.f32 %v187, %v475
    %v764 = vadd.f32 %v188, %v476
    %v765 = vadd.f32 %v189, %v477
    %v766 = vadd.f32 %v190, %v478
    %v767 = vadd.f32 %v191, %v479
    %v768 = vadd.f32 %v192, %v480
    %v769 = vadd.f32 %v193, %v481
    %v770 = vadd.f32 %v194, %v482
    %v771 = vadd.f32 %v195, %v483
    %v772 = vadd.f32 %v196, %v484
    %v773 = vadd.f32 %v197, %v485
    %v774 = vadd.f32 %v198, %v486
    %v775 = vadd.f32 %v199, %v487
    %v776 = vadd.f32 %v200, %v488
    %v777 = vadd.f32 %v201, %v489
    %v778 = vadd.f32 %v202, %v490
    %v779 = vadd.f32 %v203, %v491
    %v780 = vadd.f32 %v204, %v492
    %v781 = vadd.f32 %v205, %v493
    %v782 = vadd.f32 %v206, %v494
    %v783 = vadd.f32 %v207, %v495
    %v784 = vadd.f32 %v208, %v496
    %v785 = vadd.f32 %v209, %v497
    %v786 = vadd.f32 %v210, %v498
    %v787 = vadd.f32 %v211, %v499
    %v788 = vadd.f32 %v212, %v500
    %v789 = vadd.f32 %v213, %v501
    %v790 = vadd.f32 %v214, %v502
    %v791 = vadd.f32 %v215, %v503
    %v792 = vadd.f32 %v216, %v504
    %v793 = vadd.f32 %v217, %v505
    %v794 = vadd.f32 %v218, %v506
    %v795 = vadd.f32 %v219, %v507
    %v796 = vadd.f32 %v220, %v508
    %v797 = vadd.f32 %v221, %v509
    %v798 = vadd.f32 %v222, %v510
    %v799 = vadd.f32 %v223, %v511
    %v800 = vadd.f32 %v224, %v512
    %v801 = vadd.f32 %v225, %v513
    %v802 = vadd.f32 %v226, %v514
    %v803 = vadd.f32 %v227, %v515
    %v804 = vadd.f32 %v228, %v516
    %v805 = vadd.f32 %v229, %v517
    %v806 = vadd.f32 %v230, %v518
    %v807 = vadd.f32 %v231, %v519
    %v808 = vadd.f32 %v232, %v520
    %v809 = vadd.f32 %v233, %v521
    %v810 = vadd.f32 %v234, %v522
    %v811 = vadd.f32 %v235, %v523
    %v812 = vadd.f32 %v236, %v524
    %v813 = vadd.f32 %v237, %v525
    %v814 = vadd.f32 %v238, %v526
    %v815 = vadd.f32 %v239, %v527
    %v816 = vadd.f32 %v240, %v528
    %v817 = vadd.f32 %v241, %v529
    %v818 = vadd.f32 %v242, %v530
    %v819 = vadd.f32 %v243, %v531
    %v820 = vadd.f32 %v244, %v532
    %v821 = vadd.f32 %v245, %v533
    %v822 = vadd.f32 %v246, %v534
    %v823 = vadd.f32 %v247, %v535
    %v824 = vadd.f32 %v248, %v536
    %v825 = vadd.f32 %v249, %v537
    %v826 = vadd.f32 %v250, %v538
    %v827 = vadd.f32 %v251, %v539
    %v828 = vadd.f32 %v252, %v540
    %v829 = vadd.f32 %v253, %v541
    %v830 = vadd.f32 %v254, %v542
    %v831 = vadd.f32 %v255, %v543
    %v832 = vadd.f32 %v256, %v544
    %v833 = vadd.f32 %v257, %v545
    %v834 = vadd.f32 %v258, %v546
    %v835 = vadd.f32 %v259, %v547
    %v836 = vadd.f32 %v260, %v548
    %v837 = vadd.f32 %v261, %v549
    %v838 = vadd.f32 %v262, %v550
    %v839 = vadd.f32 %v263, %v551
    %v840 = vadd.f32 %v264, %v552
    %v841 = vadd.f32 %v265, %v553
    %v842 = vadd.f32 %v266, %v554
    %v843 = vadd.f32 %v267, %v555
    %v844 = vadd.f32 %v268, %v556
    %v845 = vadd.f32 %v269, %v557
    %v846 = vadd.f32 %v270, %v558
    %v847 = vadd.f32 %v271, %v559
    %v848 = vadd.f32 %v272, %v560
    %v849 = vadd.f32 %v273, %v561
    %v850 = vadd.f32 %v274, %v562
    %v851 = vadd.f32 %v275, %v563
    %v852 = vadd.f32 %v276, %v564
    %v853 = vadd.f32 %v277, %v565
    %v854 = vadd.f32 %v278, %v566
    %v855 = vadd.f32 %v279, %v567
    %v856 = vadd.f32 %v280, %v568
    %v857 = vadd.f32 %v281, %v569
    %v858 = vadd.f32 %v282, %v570
    %v859 = vadd.f32 %v283, %v571
    %v860 = vadd.f32 %v284, %v572
    %v861 = vadd.f32 %v285, %v573
    %v862 = vadd.f32 %v286, %v574
    %v863 = vadd.f32 %v287, %v575
    %v864 = vadd.f32 %v288, %v576
    %v865 = vadd.f32 %v289, %v577
    %v866 = vadd.f32 %v290, %v578
    %v867 = vadd.f32 %v291, %v579
    %v868 = vadd.f32 %v292, %v580
    %v869 = vadd.f32 %v293, %v581
    %v870 = vadd.f32 %v294, %v582
    %v871 = vadd.f32 %v295, %v583
    %v872 = vadd.f32 %v296, %v584
    %v873 = vadd.f32 %v297, %v585
    %v874 = vadd.f32 %v298, %v586
    %v875 = vadd.f32 %v299, %v587
    %v876 = vadd.f32 %v300, %v588
    %v877 = vadd.f32 %v301, %v589
    %v878 = vadd.f32 %v302, %v590
    %v879 = vadd.f32 %v303, %v591
    %v880 = vadd.f32 %v304, %v592
    %v881 = vadd.f32 %v305, %v593
    %v882 = vadd.f32 %v306, %v594
    %v883 = vadd.f32 %v307, %v595
    %v884 = vadd.f32 %v308, %v596
    %v885 = vadd.f32 %v309, %v597
    %v886 = vadd.f32 %v310, %v598
    %v887 = vadd.f32 %v311, %v599
    %v888 = vadd.f32 %v312, %v600
    %v889 = vadd.f32 %v313, %v601
    %v890 = vadd.f32 %v314, %v602
    %v891 = vadd.f32 %v315, %v603
    %892 = vst [vmem:[#allocation5] sm:$0xff] %v604
    %893 = vst [vmem:[#allocation5 + $0x8] sm:$0xff] %v605
    %894 = vst [vmem:[#allocation5 + $0x10] sm:$0xff] %v606
    %895 = vst [vmem:[#allocation5 + $0x18] sm:$0xff] %v607
    %896 = vst [vmem:[#allocation5 + $0x20] sm:$0xff] %v608
    %897 = vst [vmem:[#allocation5 + $0x28] sm:$0xff] %v609
    %898 = vst [vmem:[#allocation5 + $0x30] sm:$0xff] %v610
    %899 = vst [vmem:[#allocation5 + $0x38] sm:$0xff] %v611
    %900 = vst [vmem:[#allocation5 + $0x40] sm:$0xff] %v612
    %901 = vst [vmem:[#allocation5 + $0x48] sm:$0xff] %v613
    %902 = vst [vmem:[#allocation5 + $0x50] sm:$0xff] %v614
    %903 = vst [vmem:[#allocation5 + $0x58] sm:$0xff] %v615
    %904 = vst [vmem:[#allocation5 + $0x60] sm:$0xff] %v616
    %905 = vst [vmem:[#allocation5 + $0x68] sm:$0xff] %v617
    %906 = vst [vmem:[#allocation5 + $0x70] sm:$0xff] %v618
    %907 = vst [vmem:[#allocation5 + $0x78] sm:$0xff] %v619
    %908 = vst [vmem:[#allocation5 + $0x80] sm:$0xff] %v620
    %909 = vst [vmem:[#allocation5 + $0x88] sm:$0xff] %v621
    %910 = vst [vmem:[#allocation5 + $0x90] sm:$0xff] %v622
    %911 = vst [vmem:[#allocation5 + $0x98] sm:$0xff] %v623
    %912 = vst [vmem:[#allocation5 + $0xa0] sm:$0xff] %v624
    %913 = vst [vmem:[#allocation5 + $0xa8] sm:$0xff] %v625
    %914 = vst [vmem:[#allocation5 + $0xb0] sm:$0xff] %v626
    %915 = vst [vmem:[#allocation5 + $0xb8] sm:$0xff] %v627
    %916 = vst [vmem:[#allocation5 + $0xc0] sm:$0xff] %v628
    %917 = vst [vmem:[#allocation5 + $0xc8] sm:$0xff] %v629
    %918 = vst [vmem:[#allocation5 + $0xd0] sm:$0xff] %v630
    %919 = vst [vmem:[#allocation5 + $0xd8] sm:$0xff] %v631
    %920 = vst [vmem:[#allocation5 + $0xe0] sm:$0xff] %v632
    %921 = vst [vmem:[#allocation5 + $0xe8] sm:$0xff] %v633
    %922 = vst [vmem:[#allocation5 + $0xf0] sm:$0xff] %v634
    %923 = vst [vmem:[#allocation5 + $0xf8] sm:$0xff] %v635
    %924 = vst [vmem:[#allocation5 + $0x100] sm:$0xff] %v636
    %925 = vst [vmem:[#allocation5 + $0x108] sm:$0xff] %v637
    %926 = vst [vmem:[#allocation5 + $0x110] sm:$0xff] %v638
    %927 = vst [vmem:[#allocation5 + $0x118] sm:$0xff] %v639
    %928 = vst [vmem:[#allocation5 + $0x120] sm:$0xff] %v640
    %929 = vst [vmem:[#allocation5 + $0x128] sm:$0xff] %v641
    %930 = vst [vmem:[#allocation5 + $0x130] sm:$0xff] %v642
    %931 = vst [vmem:[#allocation5 + $0x138] sm:$0xff] %v643
    %932 = vst [vmem:[#allocation5 + $0x140] sm:$0xff] %v644
    %933 = vst [vmem:[#allocation5 + $0x148] sm:$0xff] %v645
    %934 = vst [vmem:[#allocation5 + $0x150] sm:$0xff] %v646
    %935 = vst [vmem:[#allocation5 + $0x158] sm:$0xff] %v647
    %936 = vst [vmem:[#allocation5 + $0x160] sm:$0xff] %v648
    %937 = vst [vmem:[#allocation5 + $0x168] sm:$0xff] %v649
    %938 = vst [vmem:[#allocation5 + $0x170] sm:$0xff] %v650
    %939 = vst [vmem:[#allocation5 + $0x178] sm:$0xff] %v651
    %940 = vst [vmem:[#allocation5 + $0x180] sm:$0xff] %v652
    %941 = vst [vmem:[#allocation5 + $0x188] sm:$0xff] %v653
    %942 = vst [vmem:[#allocation5 + $0x190] sm:$0xff] %v654
    %943 = vst [vmem:[#allocation5 + $0x198] sm:$0xff] %v655
    %944 = vst [vmem:[#allocation5 + $0x1a0] sm:$0xff] %v656
    %945 = vst [vmem:[#allocation5 + $0x1a8] sm:$0xff] %v657
    %946 = vst [vmem:[#allocation5 + $0x1b0] sm:$0xff] %v658
    %947 = vst [vmem:[#allocation5 + $0x1b8] sm:$0xff] %v659
    %948 = vst [vmem:[#allocation5 + $0x1c0] sm:$0xff] %v660
    %949 = vst [vmem:[#allocation5 + $0x1c8] sm:$0xff] %v661
    %950 = vst [vmem:[#allocation5 + $0x1d0] sm:$0xff] %v662
    %951 = vst [vmem:[#allocation5 + $0x1d8] sm:$0xff] %v663
    %952 = vst [vmem:[#allocation5 + $0x1e0] sm:$0xff] %v664
    %953 = vst [vmem:[#allocation5 + $0x1e8] sm:$0xff] %v665
    %954 = vst [vmem:[#allocation5 + $0x1f0] sm:$0xff] %v666
    %955 = vst [vmem:[#allocation5 + $0x1f8] sm:$0xff] %v667
    %956 = vst [vmem:[#allocation5 + $0x200] sm:$0xff] %v668
    %957 = vst [vmem:[#allocation5 + $0x208] sm:$0xff] %v669
    %958 = vst [vmem:[#allocation5 + $0x210] sm:$0xff] %v670
    %959 = vst [vmem:[#allocation5 + $0x218] sm:$0xff] %v671
    %960 = vst [vmem:[#allocation5 + $0x220] sm:$0xff] %v672
    %961 = vst [vmem:[#allocation5 + $0x228] sm:$0xff] %v673
    %962 = vst [vmem:[#allocation5 + $0x230] sm:$0xff] %v674
    %963 = vst [vmem:[#allocation5 + $0x238] sm:$0xff] %v675
    %964 = vst [vmem:[#allocation5 + $0x240] sm:$0xff] %v676
    %965 = vst [vmem:[#allocation5 + $0x248] sm:$0xff] %v677
    %966 = vst [vmem:[#allocation5 + $0x250] sm:$0xff] %v678
    %967 = vst [vmem:[#allocation5 + $0x258] sm:$0xff] %v679
    %968 = vst [vmem:[#allocation5 + $0x260] sm:$0xff] %v680
    %969 = vst [vmem:[#allocation5 + $0x268] sm:$0xff] %v681
    %970 = vst [vmem:[#allocation5 + $0x270] sm:$0xff] %v682
    %971 = vst [vmem:[#allocation5 + $0x278] sm:$0xff] %v683
    %972 = vst [vmem:[#allocation5 + $0x280] sm:$0xff] %v684
    %973 = vst [vmem:[#allocation5 + $0x288] sm:$0xff] %v685
    %974 = vst [vmem:[#allocation5 + $0x290] sm:$0xff] %v686
    %975 = vst [vmem:[#allocation5 + $0x298] sm:$0xff] %v687
    %976 = vst [vmem:[#allocation5 + $0x2a0] sm:$0xff] %v688
    %977 = vst [vmem:[#allocation5 + $0x2a8] sm:$0xff] %v689
    %978 = vst [vmem:[#allocation5 + $0x2b0] sm:$0xff] %v690
    %979 = vst [vmem:[#allocation5 + $0x2b8] sm:$0xff] %v691
    %980 = vst [vmem:[#allocation5 + $0x2c0] sm:$0xff] %v692
    %981 = vst [vmem:[#allocation5 + $0x2c8] sm:$0xff] %v693
    %982 = vst [vmem:[#allocation5 + $0x2d0] sm:$0xff] %v694
    %983 = vst [vmem:[#allocation5 + $0x2d8] sm:$0xff] %v695
    %984 = vst [vmem:[#allocation5 + $0x2e0] sm:$0xff] %v696
    %985 = vst [vmem:[#allocation5 + $0x2e8] sm:$0xff] %v697
    %986 = vst [vmem:[#allocation5 + $0x2f0] sm:$0xff] %v698
    %987 = vst [vmem:[#allocation5 + $0x2f8] sm:$0xff] %v699
    %988 = vst [vmem:[#allocation5 + $0x300] sm:$0xff] %v700
    %989 = vst [vmem:[#allocation5 + $0x308] sm:$0xff] %v701
    %990 = vst [vmem:[#allocation5 + $0x310] sm:$0xff] %v702
    %991 = vst [vmem:[#allocation5 + $0x318] sm:$0xff] %v703
    %992 = vst [vmem:[#allocation5 + $0x320] sm:$0xff] %v704
    %993 = vst [vmem:[#allocation5 + $0x328] sm:$0xff] %v705
    %994 = vst [vmem:[#allocation5 + $0x330] sm:$0xff] %v706
    %995 = vst [vmem:[#allocation5 + $0x338] sm:$0xff] %v707
    %996 = vst [vmem:[#allocation5 + $0x340] sm:$0xff] %v708
    %997 = vst [vmem:[#allocation5 + $0x348] sm:$0xff] %v709
    %998 = vst [vmem:[#allocation5 + $0x350] sm:$0xff] %v710
    %999 = vst [vmem:[#allocation5 + $0x358] sm:$0xff] %v711
    %1000 = vst [vmem:[#allocation5 + $0x360] sm:$0xff] %v712
    %1001 = vst [vmem:[#allocation5 + $0x368] sm:$0xff] %v713
    %1002 = vst [vmem:[#allocation5 + $0x370] sm:$0xff] %v714
    %1003 = vst [vmem:[#allocation5 + $0x378] sm:$0xff] %v715
    %1004 = vst [vmem:[#allocation5 + $0x380] sm:$0xff] %v716
    %1005 = vst [vmem:[#allocation5 + $0x388] sm:$0xff] %v717
    %1006 = vst [vmem:[#allocation5 + $0x390] sm:$0xff] %v718
    %1007 = vst [vmem:[#allocation5 + $0x398] sm:$0xff] %v719
    %1008 = vst [vmem:[#allocation5 + $0x3a0] sm:$0xff] %v720
    %1009 = vst [vmem:[#allocation5 + $0x3a8] sm:$0xff] %v721
    %1010 = vst [vmem:[#allocation5 + $0x3b0] sm:$0xff] %v722
    %1011 = vst [vmem:[#allocation5 + $0x3b8] sm:$0xff] %v723
    %1012 = vst [vmem:[#allocation5 + $0x3c0] sm:$0xff] %v724
    %1013 = vst [vmem:[#allocation5 + $0x3c8] sm:$0xff] %v725
    %1014 = vst [vmem:[#allocation5 + $0x3d0] sm:$0xff] %v726
    %1015 = vst [vmem:[#allocation5 + $0x3d8] sm:$0xff] %v727
    %1016 = vst [vmem:[#allocation5 + $0x3e0] sm:$0xff] %v728
    %1017 = vst [vmem:[#allocation5 + $0x3e8] sm:$0xff] %v729
    %1018 = vst [vmem:[#allocation5 + $0x3f0] sm:$0xff] %v730
    %1019 = vst [vmem:[#allocation5 + $0x3f8] sm:$0xff] %v731
    %1020 = vst [vmem:[#allocation5 + $0x400] sm:$0xff] %v732
    %1021 = vst [vmem:[#allocation5 + $0x408] sm:$0xff] %v733
    %1022 = vst [vmem:[#allocation5 + $0x410] sm:$0xff] %v734
    %1023 = vst [vmem:[#allocation5 + $0x418] sm:$0xff] %v735
    %1024 = vst [vmem:[#allocation5 + $0x420] sm:$0xff] %v736
    %1025 = vst [vmem:[#allocation5 + $0x428] sm:$0xff] %v737
    %1026 = vst [vmem:[#allocation5 + $0x430] sm:$0xff] %v738
    %1027 = vst [vmem:[#allocation5 + $0x438] sm:$0xff] %v739
    %1028 = vst [vmem:[#allocation5 + $0x440] sm:$0xff] %v740
    %1029 = vst [vmem:[#allocation5 + $0x448] sm:$0xff] %v741
    %1030 = vst [vmem:[#allocation5 + $0x450] sm:$0xff] %v742
    %1031 = vst [vmem:[#allocation5 + $0x458] sm:$0xff] %v743
    %1032 = vst [vmem:[#allocation5 + $0x460] sm:$0xff] %v744
    %1033 = vst [vmem:[#allocation5 + $0x468] sm:$0xff] %v745
    %1034 = vst [vmem:[#allocation5 + $0x470] sm:$0xff] %v746
    %1035 = vst [vmem:[#allocation5 + $0x478] sm:$0xff] %v747
    %1036 = vst [vmem:[#allocation5 + $0x480] sm:$0xff] %v748
    %1037 = vst [vmem:[#allocation5 + $0x488] sm:$0xff] %v749
    %1038 = vst [vmem:[#allocation5 + $0x490] sm:$0xff] %v750
    %1039 = vst [vmem:[#allocation5 + $0x498] sm:$0xff] %v751
    %1040 = vst [vmem:[#allocation5 + $0x4a0] sm:$0xff] %v752
    %1041 = vst [vmem:[#allocation5 + $0x4a8] sm:$0xff] %v753
    %1042 = vst [vmem:[#allocation5 + $0x4b0] sm:$0xff] %v754
    %1043 = vst [vmem:[#allocation5 + $0x4b8] sm:$0xff] %v755
    %1044 = vst [vmem:[#allocation5 + $0x4c0] sm:$0xff] %v756
    %1045 = vst [vmem:[#allocation5 + $0x4c8] sm:$0xff] %v757
    %1046 = vst [vmem:[#allocation5 + $0x4d0] sm:$0xff] %v758
    %1047 = vst [vmem:[#allocation5 + $0x4d8] sm:$0xff] %v759
    %1048 = vst [vmem:[#allocation5 + $0x4e0] sm:$0xff] %v760
    %1049 = vst [vmem:[#allocation5 + $0x4e8] sm:$0xff] %v761
    %1050 = vst [vmem:[#allocation5 + $0x4f0] sm:$0xff] %v762
    %1051 = vst [vmem:[#allocation5 + $0x4f8] sm:$0xff] %v763
    %1052 = vst [vmem:[#allocation5 + $0x500] sm:$0xff] %v764
    %1053 = vst [vmem:[#allocation5 + $0x508] sm:$0xff] %v765
    %1054 = vst [vmem:[#allocation5 + $0x510] sm:$0xff] %v766
    %1055 = vst [vmem:[#allocation5 + $0x518] sm:$0xff] %v767
    %1056 = vst [vmem:[#allocation5 + $0x520] sm:$0xff] %v768
    %1057 = vst [vmem:[#allocation5 + $0x528] sm:$0xff] %v769
    %1058 = vst [vmem:[#allocation5 + $0x530] sm:$0xff] %v770
    %1059 = vst [vmem:[#allocation5 + $0x538] sm:$0xff] %v771
    %1060 = vst [vmem:[#allocation5 + $0x540] sm:$0xff] %v772
    %1061 = vst [vmem:[#allocation5 + $0x548] sm:$0xff] %v773
    %1062 = vst [vmem:[#allocation5 + $0x550] sm:$0xff] %v774
    %1063 = vst [vmem:[#allocation5 + $0x558] sm:$0xff] %v775
    %1064 = vst [vmem:[#allocation5 + $0x560] sm:$0xff] %v776
    %1065 = vst [vmem:[#allocation5 + $0x568] sm:$0xff] %v777
    %1066 = vst [vmem:[#allocation5 + $0x570] sm:$0xff] %v778
    %1067 = vst [vmem:[#allocation5 + $0x578] sm:$0xff] %v779
    %1068 = vst [vmem:[#allocation5 + $0x580] sm:$0xff] %v780
    %1069 = vst [vmem:[#allocation5 + $0x588] sm:$0xff] %v781
    %1070 = vst [vmem:[#allocation5 + $0x590] sm:$0xff] %v782
    %1071 = vst [vmem:[#allocation5 + $0x598] sm:$0xff] %v783
    %1072 = vst [vmem:[#allocation5 + $0x5a0] sm:$0xff] %v784
    %1073 = vst [vmem:[#allocation5 + $0x5a8] sm:$0xff] %v785
    %1074 = vst [vmem:[#allocation5 + $0x5b0] sm:$0xff] %v786
    %1075 = vst [vmem:[#allocation5 + $0x5b8] sm:$0xff] %v787
    %1076 = vst [vmem:[#allocation5 + $0x5c0] sm:$0xff] %v788
    %1077 = vst [vmem:[#allocation5 + $0x5c8] sm:$0xff] %v789
    %1078 = vst [vmem:[#allocation5 + $0x5d0] sm:$0xff] %v790
    %1079 = vst [vmem:[#allocation5 + $0x5d8] sm:$0xff] %v791
    %1080 = vst [vmem:[#allocation5 + $0x5e0] sm:$0xff] %v792
    %1081 = vst [vmem:[#allocation5 + $0x5e8] sm:$0xff] %v793
    %1082 = vst [vmem:[#allocation5 + $0x5f0] sm:$0xff] %v794
    %1083 = vst [vmem:[#allocation5 + $0x5f8] sm:$0xff] %v795
    %1084 = vst [vmem:[#allocation5 + $0x600] sm:$0xff] %v796
    %1085 = vst [vmem:[#allocation5 + $0x608] sm:$0xff] %v797
    %1086 = vst [vmem:[#allocation5 + $0x610] sm:$0xff] %v798
    %1087 = vst [vmem:[#allocation5 + $0x618] sm:$0xff] %v799
    %1088 = vst [vmem:[#allocation5 + $0x620] sm:$0xff] %v800
    %1089 = vst [vmem:[#allocation5 + $0x628] sm:$0xff] %v801
    %1090 = vst [vmem:[#allocation5 + $0x630] sm:$0xff] %v802
    %1091 = vst [vmem:[#allocation5 + $0x638] sm:$0xff] %v803
    %1092 = vst [vmem:[#allocation5 + $0x640] sm:$0xff] %v804
    %1093 = vst [vmem:[#allocation5 + $0x648] sm:$0xff] %v805
    %1094 = vst [vmem:[#allocation5 + $0x650] sm:$0xff] %v806
    %1095 = vst [vmem:[#allocation5 + $0x658] sm:$0xff] %v807
    %1096 = vst [vmem:[#allocation5 + $0x660] sm:$0xff] %v808
    %1097 = vst [vmem:[#allocation5 + $0x668] sm:$0xff] %v809
    %1098 = vst [vmem:[#allocation5 + $0x670] sm:$0xff] %v810
    %1099 = vst [vmem:[#allocation5 + $0x678] sm:$0xff] %v811
    %1100 = vst [vmem:[#allocation5 + $0x680] sm:$0xff] %v812
    %1101 = vst [vmem:[#allocation5 + $0x688] sm:$0xff] %v813
    %1102 = vst [vmem:[#allocation5 + $0x690] sm:$0xff] %v814
    %1103 = vst [vmem:[#allocation5 + $0x698] sm:$0xff] %v815
    %1104 = vst [vmem:[#allocation5 + $0x6a0] sm:$0xff] %v816
    %1105 = vst [vmem:[#allocation5 + $0x6a8] sm:$0xff] %v817
    %1106 = vst [vmem:[#allocation5 + $0x6b0] sm:$0xff] %v818
    %1107 = vst [vmem:[#allocation5 + $0x6b8] sm:$0xff] %v819
    %1108 = vst [vmem:[#allocation5 + $0x6c0] sm:$0xff] %v820
    %1109 = vst [vmem:[#allocation5 + $0x6c8] sm:$0xff] %v821
    %1110 = vst [vmem:[#allocation5 + $0x6d0] sm:$0xff] %v822
    %1111 = vst [vmem:[#allocation5 + $0x6d8] sm:$0xff] %v823
    %1112 = vst [vmem:[#allocation5 + $0x6e0] sm:$0xff] %v824
    %1113 = vst [vmem:[#allocation5 + $0x6e8] sm:$0xff] %v825
    %1114 = vst [vmem:[#allocation5 + $0x6f0] sm:$0xff] %v826
    %1115 = vst [vmem:[#allocation5 + $0x6f8] sm:$0xff] %v827
    %1116 = vst [vmem:[#allocation5 + $0x700] sm:$0xff] %v828
    %1117 = vst [vmem:[#allocation5 + $0x708] sm:$0xff] %v829
    %1118 = vst [vmem:[#allocation5 + $0x710] sm:$0xff] %v830
    %1119 = vst [vmem:[#allocation5 + $0x718] sm:$0xff] %v831
    %1120 = vst [vmem:[#allocation5 + $0x720] sm:$0xff] %v832
    %1121 = vst [vmem:[#allocation5 + $0x728] sm:$0xff] %v833
    %1122 = vst [vmem:[#allocation5 + $0x730] sm:$0xff] %v834
    %1123 = vst [vmem:[#allocation5 + $0x738] sm:$0xff] %v835
    %1124 = vst [vmem:[#allocation5 + $0x740] sm:$0xff] %v836
    %1125 = vst [vmem:[#allocation5 + $0x748] sm:$0xff] %v837
    %1126 = vst [vmem:[#allocation5 + $0x750] sm:$0xff] %v838
    %1127 = vst [vmem:[#allocation5 + $0x758] sm:$0xff] %v839
    %1128 = vst [vmem:[#allocation5 + $0x760] sm:$0xff] %v840
    %1129 = vst [vmem:[#allocation5 + $0x768] sm:$0xff] %v841
    %1130 = vst [vmem:[#allocation5 + $0x770] sm:$0xff] %v842
    %1131 = vst [vmem:[#allocation5 + $0x778] sm:$0xff] %v843
    %1132 = vst [vmem:[#allocation5 + $0x780] sm:$0xff] %v844
    %1133 = vst [vmem:[#allocation5 + $0x788] sm:$0xff] %v845
    %1134 = vst [vmem:[#allocation5 + $0x790] sm:$0xff] %v846
    %1135 = vst [vmem:[#allocation5 + $0x798] sm:$0xff] %v847
    %1136 = vst [vmem:[#allocation5 + $0x7a0] sm:$0xff] %v848
    %1137 = vst [vmem:[#allocation5 + $0x7a8] sm:$0xff] %v849
    %1138 = vst [vmem:[#allocation5 + $0x7b0] sm:$0xff] %v850
    %1139 = vst [vmem:[#allocation5 + $0x7b8] sm:$0xff] %v851
    %1140 = vst [vmem:[#allocation5 + $0x7c0] sm:$0xff] %v852
    %1141 = vst [vmem:[#allocation5 + $0x7c8] sm:$0xff] %v853
    %1142 = vst [vmem:[#allocation5 + $0x7d0] sm:$0xff] %v854
    %1143 = vst [vmem:[#allocation5 + $0x7d8] sm:$0xff] %v855
    %1144 = vst [vmem:[#allocation5 + $0x7e0] sm:$0xff] %v856
    %1145 = vst [vmem:[#allocation5 + $0x7e8] sm:$0xff] %v857
    %1146 = vst [vmem:[#allocation5 + $0x7f0] sm:$0xff] %v858
    %1147 = vst [vmem:[#allocation5 + $0x7f8] sm:$0xff] %v859
    %1148 = vst [vmem:[#allocation5 + $0x800] sm:$0xff] %v860
    %1149 = vst [vmem:[#allocation5 + $0x808] sm:$0xff] %v861
    %1150 = vst [vmem:[#allocation5 + $0x810] sm:$0xff] %v862
    %1151 = vst [vmem:[#allocation5 + $0x818] sm:$0xff] %v863
    %1152 = vst [vmem:[#allocation5 + $0x820] sm:$0xff] %v864
    %1153 = vst [vmem:[#allocation5 + $0x828] sm:$0xff] %v865
    %1154 = vst [vmem:[#allocation5 + $0x830] sm:$0xff] %v866
    %1155 = vst [vmem:[#allocation5 + $0x838] sm:$0xff] %v867
    %1156 = vst [vmem:[#allocation5 + $0x840] sm:$0xff] %v868
    %1157 = vst [vmem:[#allocation5 + $0x848] sm:$0xff] %v869
    %1158 = vst [vmem:[#allocation5 + $0x850] sm:$0xff] %v870
    %1159 = vst [vmem:[#allocation5 + $0x858] sm:$0xff] %v871
    %1160 = vst [vmem:[#allocation5 + $0x860] sm:$0xff] %v872
    %1161 = vst [vmem:[#allocation5 + $0x868] sm:$0xff] %v873
    %1162 = vst [vmem:[#allocation5 + $0x870] sm:$0xff] %v874
    %1163 = vst [vmem:[#allocation5 + $0x878] sm:$0xff] %v875
    %1164 = vst [vmem:[#allocation5 + $0x880] sm:$0xff] %v876
    %1165 = vst [vmem:[#allocation5 + $0x888] sm:$0xff] %v877
    %1166 = vst [vmem:[#allocation5 + $0x890] sm:$0xff] %v878
    %1167 = vst [vmem:[#allocation5 + $0x898] sm:$0xff] %v879
    %1168 = vst [vmem:[#allocation5 + $0x8a0] sm:$0xff] %v880
    %1169 = vst [vmem:[#allocation5 + $0x8a8] sm:$0xff] %v881
    %1170 = vst [vmem:[#allocation5 + $0x8b0] sm:$0xff] %v882
    %1171 = vst [vmem:[#allocation5 + $0x8b8] sm:$0xff] %v883
    %1172 = vst [vmem:[#allocation5 + $0x8c0] sm:$0xff] %v884
    %1173 = vst [vmem:[#allocation5 + $0x8c8] sm:$0xff] %v885
    %1174 = vst [vmem:[#allocation5 + $0x8d0] sm:$0xff] %v886
    %1175 = vst [vmem:[#allocation5 + $0x8d8] sm:$0xff] %v887
    %1176 = vst [vmem:[#allocation5 + $0x8e0] sm:$0xff] %v888
    %1177 = vst [vmem:[#allocation5 + $0x8e8] sm:$0xff] %v889
    %1178 = vst [vmem:[#allocation5 + $0x8f0] sm:$0xff] %v890
    %1179 = vst [vmem:[#allocation5 + $0x8f8] sm:$0xff] %v891
    // Predicated region
    $region14: #{tpu_custom_call.1} parent=1 // pred_check
      _
    $region15: #{tpu_custom_call.1} parent=1 // pred_check_branch
      %1181 = sbr.rel (0) target = $region17
    $region16: #{tpu_custom_call.1} parent=1 // pred_region
      %1183 = vsyncadd [#allocation4], 0
      %s1184 = sshll.u32 [#allocation5], 4
      %s1185 = int_to_ptr.vmem [resolvable:$true] %s1184
      %s1186 = sshll.u32 %s2, 4
      %s1187 = int_to_ptr.hbm [resolvable:$true] %s1186
      %1192 = dma.vmem_to_hbm [thread:$0]  %s1185, 36864, %s1187, [#allocation4], 768, 768, 48
    $region17: #{tpu_custom_call.1} parent=1 // pred_fallthru
      _
    // Predicated region
    $region18: #{tpu_custom_call.1} parent=1 // pred_check
      _
    $region19: #{tpu_custom_call.1} parent=1 // pred_check_branch
      %1194 = sbr.rel (0) target = $region21
    $region20: #{tpu_custom_call.1} parent=1 // pred_region
      %1196 = dma.done [#allocation4], 36864
    $region21: #{tpu_custom_call.1} parent=1 // pred_fallthru
      _
    %1197 = vsyncpa [#allocation3], 1
    %1198 = vsyncpa [#allocation4], 1

</llo_original>
